<compile_context>
chip_gen: v7x
topology: tpu7x:2x2x1
jax: 0.10.0
libtpu: 0.0.40
codegen_flags: <defaults>
</compile_context>

<pallas_src>
import functools

import jax
import jax.numpy as jnp
from jax.experimental import pallas as pl
from jax.experimental.pallas import tpu as pltpu


# ----------------------------------------------------------------------------
# Tiled matmul (+ optional clamp) : used for qkv_proj and o_proj
# ----------------------------------------------------------------------------
def _matmul_clip_kernel(x_ref, w_ref, o_ref, acc_ref, *, clip):
    @pl.when(pl.program_id(2) == 0)
    def _():
        acc_ref[...] = jnp.zeros_like(acc_ref)

    # Inputs stay in their native dtype (bf16 in production); accumulate in f32.
    acc_ref[...] += jnp.dot(x_ref[...], w_ref[...],
                            preferred_element_type=jnp.float32)

    @pl.when(pl.program_id(2) == pl.num_programs(2) - 1)
    def _():
        acc = acc_ref[...]
        if clip is not None:                       # OLMo clip_qkv (f32 clamp)
            acc = jnp.clip(acc, -clip, clip)
        o_ref[...] = acc.astype(o_ref.dtype)


def _fit(block, dim):
    """Pick a tile size: `block` if it divides `dim`, else the full dim."""
    if dim <= block or dim % block != 0:
        return dim
    return block


def _tiled_matmul(x, w, *, clip=None, block_m=256, block_n=512, block_k=512):
    M, K = x.shape
    _, N = w.shape
    bm, bn, bk = _fit(block_m, M), _fit(block_n, N), _fit(block_k, K)
    grid = (M // bm, N // bn, K // bk)
    kernel = functools.partial(_matmul_clip_kernel, clip=clip)
    return pl.pallas_call(
        kernel,
        out_shape=jax.ShapeDtypeStruct((M, N), x.dtype),
        grid_spec=pltpu.PrefetchScalarGridSpec(
            num_scalar_prefetch=0,
            grid=grid,
            in_specs=[pl.BlockSpec((bm, bk), lambda i, j, k: (i, k)),
                      pl.BlockSpec((bk, bn), lambda i, j, k: (k, j))],
            out_specs=pl.BlockSpec((bm, bn), lambda i, j, k: (i, j)),
            scratch_shapes=[pltpu.VMEM((bm, bn), jnp.float32)]),
        compiler_params=pltpu.CompilerParams(
            dimension_semantics=("parallel", "parallel", "arbitrary"),
            # Explicit, generation-safe scoped budget (fits v7x's 64 MiB VMEM).
            vmem_limit_bytes=32 * 1024 * 1024),
    )(x, w)


# ----------------------------------------------------------------------------
# Fused RoPE + causal flash attention (online softmax)
# ----------------------------------------------------------------------------
def _flash_rope_kernel(q_ref, k_ref, v_ref, cq_ref, sq_ref, ck_ref, sk_ref,
                       o_ref, qrot_ref, m_ref, l_ref, acc_ref,
                       *, block_q, block_kv, head_dim):
    qi = pl.program_id(1)
    kv = pl.program_id(2)
    half = head_dim // 2

    q_start = qi * block_q
    kv_start = kv * block_kv

    def rotate(t, cos, sin):
        # GPT-NeoX RoPE on a whole (heads_block, T, d) slab.
        # cos/sin are full-width (T, d) tables broadcast across heads.
        t1 = t[..., :half]
        t2 = t[..., half:]
        rot = jnp.concatenate([-t2, t1], axis=-1)
        return t * cos[None, :, :] + rot * sin[None, :, :]

    @pl.when(kv == 0)
    def _():
        m_ref[...] = jnp.full(m_ref.shape, -jnp.inf, jnp.float32)
        l_ref[...] = jnp.zeros(l_ref.shape, jnp.float32)
        acc_ref[...] = jnp.zeros(acc_ref.shape, jnp.float32)
        # Rotate + scale Q once per (head-block, q-tile): elementwise in f32,
        # stored back in the matmul dtype.  Softmax scale is pre-folded into
        # the q-side cos/sin tables by the wrapper.
        qf = q_ref[...].astype(jnp.float32)
        qrot_ref[...] = rotate(qf, cq_ref[...], sq_ref[...]).astype(qrot_ref.dtype)

    # Skip KV tiles that lie entirely above the causal diagonal (~2x fewer FLOPs).
    @pl.when(kv_start <= q_start + block_q - 1)
    def _():
        kf = k_ref[...].astype(jnp.float32)
        k_rot = rotate(kf, ck_ref[...], sk_ref[...]).astype(k_ref.dtype)

        # Batched over the head block: one MXU call per head, no Python head loop.
        s = jnp.einsum('hqd,hkd->hqk', qrot_ref[...], k_rot,
                       preferred_element_type=jnp.float32)

        # Tile-local causal mask (no S x S materialization).
        row = q_start + jax.lax.broadcasted_iota(jnp.int32, (block_q, block_kv), 0)
        col = kv_start + jax.lax.broadcasted_iota(jnp.int32, (block_q, block_kv), 1)
        s = jnp.where((col <= row)[None, :, :], s, -1e30)

        m_prev = m_ref[...]
        m_new = jnp.maximum(m_prev, s.max(axis=-1, keepdims=True))
        alpha = jnp.exp(m_prev - m_new)
        p = jnp.exp(s - m_new)
        l_ref[...] = alpha * l_ref[...] + p.sum(axis=-1, keepdims=True)
        acc_ref[...] = alpha * acc_ref[...] + jnp.einsum(
            'hqk,hkd->hqd', p.astype(v_ref.dtype), v_ref[...],
            preferred_element_type=jnp.float32)
        m_ref[...] = m_new

    @pl.when(kv == pl.num_programs(2) - 1)
    def _():
        inv_l = pl.reciprocal(l_ref[...])
        o_ref[...] = (acc_ref[...] * inv_l).astype(o_ref.dtype)


def _flash_attention(q, k, v, cos_q, sin_q, cos_k, sin_k,
                     *, block_q=256, block_kv=256):
    NH, S, D = q.shape
    hb = next(c for c in (8, 4, 2, 1) if NH % c == 0)   # heads per MXU call
    bq, bkv = _fit(block_q, S), _fit(block_kv, S)
    grid = (NH // hb, S // bq, S // bkv)
    kernel = functools.partial(_flash_rope_kernel,
                               block_q=bq, block_kv=bkv, head_dim=D)
    return pl.pallas_call(
        kernel,
        out_shape=jax.ShapeDtypeStruct((NH, S, D), q.dtype),
        grid_spec=pltpu.PrefetchScalarGridSpec(
            num_scalar_prefetch=0,
            grid=grid,
            in_specs=[
                pl.BlockSpec((hb, bq, D), lambda h, i, j: (h, i, 0)),   # Q
                pl.BlockSpec((hb, bkv, D), lambda h, i, j: (h, j, 0)),  # K
                pl.BlockSpec((hb, bkv, D), lambda h, i, j: (h, j, 0)),  # V
                pl.BlockSpec((bq, D), lambda h, i, j: (i, 0)),          # cos (q, scaled)
                pl.BlockSpec((bq, D), lambda h, i, j: (i, 0)),          # sin (q, scaled)
                pl.BlockSpec((bkv, D), lambda h, i, j: (j, 0)),         # cos (k)
                pl.BlockSpec((bkv, D), lambda h, i, j: (j, 0)),         # sin (k)
            ],
            out_specs=pl.BlockSpec((hb, bq, D), lambda h, i, j: (h, i, 0)),
            scratch_shapes=[
                pltpu.VMEM((hb, bq, D), q.dtype),      # rotated+scaled Q
                pltpu.VMEM((hb, bq, 1), jnp.float32),  # running max
                pltpu.VMEM((hb, bq, 1), jnp.float32),  # running denom
                pltpu.VMEM((hb, bq, D), jnp.float32),  # output accumulator
            ]),
        compiler_params=pltpu.CompilerParams(
            # head & q-row axes shard across v7x's 2 TensorCores; KV is the
            # sequential reduction axis.
            dimension_semantics=("parallel", "parallel", "arbitrary"),
            vmem_limit_bytes=32 * 1024 * 1024),
    )(q, k, v, cos_q, sin_q, cos_k, sin_k)


# ----------------------------------------------------------------------------
# Full OlmoAttention forward
# ----------------------------------------------------------------------------
def olmo_attention(hidden_states, positions, w_qkv, w_o, *,
                   num_heads, head_dim, rope_theta, clip_qkv):
    S, H = hidden_states.shape
    assert H == num_heads * head_dim
    scale = head_dim ** -0.5
    half = head_dim // 2

    # Full-width (S, head_dim) RoPE tables (GPT-NeoX [cos, cos] / [sin, sin]);
    # the attention scale is folded into the q-side tables (free scaling).
    inv_freq = 1.0 / (rope_theta ** (jnp.arange(half, dtype=jnp.float32) / half))
    ang = positions.astype(jnp.float32)[:, None] * inv_freq[None, :]   # (S, half)
    cos = jnp.concatenate([jnp.cos(ang), jnp.cos(ang)], axis=-1)       # (S, d)
    sin = jnp.concatenate([jnp.sin(ang), jnp.sin(ang)], axis=-1)
    cos_q, sin_q = cos * scale, sin * scale

    # 1) QKV projection + clip_qkv (tiled, pipelined).
    qkv = _tiled_matmul(hidden_states, w_qkv, clip=clip_qkv)           # (S, 3H)

    # Layout glue (XLA): split into per-head-major (NH, S, d) slabs.
    q, k, v = jnp.split(qkv, 3, axis=-1)

    def heads_major(t):
        return t.reshape(S, num_heads, head_dim).transpose(1, 0, 2)

    q3, k3, v3 = heads_major(q), heads_major(k), heads_major(v)

    # 2) Fused RoPE + causal flash attention.
    attn = _flash_attention(q3, k3, v3, cos_q, sin_q, cos, sin)        # (NH, S, d)
    attn = attn.transpose(1, 0, 2).reshape(S, H)

    # 3) Output projection (tiled, pipelined). attention_bias=False -> no biases.
    return _tiled_matmul(attn, w_o, clip=None)


# ----------------------------------------------------------------------------
# Pure-JAX reference for correctness checking
# ----------------------------------------------------------------------------
def olmo_attention_reference(hidden_states, positions, w_qkv, w_o, *,
                             num_heads, head_dim, rope_theta, clip_qkv):
    S, H = hidden_states.shape
    scale = head_dim ** -0.5
    qkv = hidden_states.astype(jnp.float32) @ w_qkv.astype(jnp.float32)
    if clip_qkv is not None:
        qkv = jnp.clip(qkv, -clip_qkv, clip_qkv)
    q, k, v = jnp.split(qkv, 3, axis=-1)
    q = q.reshape(S, num_heads, head_dim)
    k = k.reshape(S, num_heads, head_dim)
    v = v.reshape(S, num_heads, head_dim)

    half = head_dim // 2
    inv_freq = 1.0 / (rope_theta ** (jnp.arange(half, dtype=jnp.float32) / half))
    ang = positions.astype(jnp.float32)[:, None] * inv_freq[None, :]
    cos, sin = jnp.cos(ang)[:, None, :], jnp.sin(ang)[:, None, :]

    def rope(t):
        t1, t2 = t[..., :half], t[..., half:]
        return jnp.concatenate([t1 * cos - t2 * sin, t2 * cos + t1 * sin], -1)

    q, k = rope(q), rope(k)
    scores = jnp.einsum('qhd,khd->hqk', q, k) * scale
    mask = jnp.tril(jnp.ones((S, S), bool))[None]
    scores = jnp.where(mask, scores, -1e30)
    p = jax.nn.softmax(scores, axis=-1)
    attn = jnp.einsum('hqk,khd->qhd', p, v).reshape(S, H)
    return (attn @ w_o.astype(jnp.float32)).astype(hidden_states.dtype)


if __name__ == "__main__":
    # Small OLMo-like config: hidden=32, heads=4, head_dim=8, seq=8.
    seq_len = 8
    hidden_size = 32
    num_heads = 4
    head_dim = hidden_size // num_heads
    rope_theta = 10000.0
    clip_qkv = 8.0          # OLMo config.clip_qkv

    key = jax.random.PRNGKey(0)
    k1, k2, k3 = jax.random.split(key, 3)
    hidden_states = jax.random.normal(k1, (seq_len, hidden_size), jnp.float32)
    positions = jnp.arange(seq_len, dtype=jnp.int32)
    w_qkv = jax.random.normal(k2, (hidden_size, 3 * hidden_size), jnp.float32) * 0.05
    w_o = jax.random.normal(k3, (hidden_size, hidden_size), jnp.float32) * 0.05

    out = olmo_attention(hidden_states, positions, w_qkv, w_o,
                         num_heads=num_heads, head_dim=head_dim,
                         rope_theta=rope_theta, clip_qkv=clip_qkv)
    out = jax.block_until_ready(out)

    ref = olmo_attention_reference(hidden_states, positions, w_qkv, w_o,
                                   num_heads=num_heads, head_dim=head_dim,
                                   rope_theta=rope_theta, clip_qkv=clip_qkv)
    assert out.shape == (seq_len, hidden_size)
    assert jnp.allclose(out, ref, rtol=1e-3, atol=1e-4), "mismatch vs reference"
    print("KERNEL_OK")
</pallas_src>

<mosaic_0001>
module attributes {stable_mosaic.version = 11 : i64} {
  func.func @_matmul_clip_kernel(%arg0: i32, %arg1: i32, %arg2: i32, %arg3: memref<8x32xf32, #tpu.memory_space<vmem>>, %arg4: memref<32x96xf32, #tpu.memory_space<vmem>>, %arg5: memref<8x96xf32, #tpu.memory_space<vmem>>, %arg6: memref<8x96xf32, #tpu.memory_space<vmem>>) attributes {dimension_semantics = [#tpu.dimension_semantics<parallel>, #tpu.dimension_semantics<parallel>, #tpu.dimension_semantics<arbitrary>], iteration_bounds = array<i64: 1, 1, 1>, scalar_prefetch = 0 : i64, scratch_operands = 1 : i64, tpu.core_type = #tpu.core_type<tc>, window_params = [{transform_indices = @transform_0, window_bounds = array<i64: 8, 32>}, {transform_indices = @transform_1, window_bounds = array<i64: 32, 96>}, {transform_indices = @transform_2, window_bounds = array<i64: 8, 96>}]} {
    %c0_i32 = arith.constant 0 : i32
    %0 = arith.cmpi eq, %arg2, %c0_i32 : i32
    %1 = arith.extui %0 : i1 to i32
    %c0_i32_0 = arith.constant 0 : i32
    %2 = arith.cmpi ne, %1, %c0_i32_0 : i32
    scf.if %2 {
      %cst_10 = arith.constant 0.000000e+00 : f32
      %12 = vector.broadcast %cst_10 : f32 to vector<8x96xf32>
      %c0_11 = arith.constant 0 : index
      %c0_12 = arith.constant 0 : index
      %13 = vector.load %arg6[%c0_11, %c0_12] : memref<8x96xf32, #tpu.memory_space<vmem>>, vector<8x96xf32>
      tpu.vector_store %arg6[%c0_11, %c0_12], %12 {strides = array<i32>} : memref<8x96xf32, #tpu.memory_space<vmem>>, vector<8x96xf32>,
    } else {
    }
    %c0 = arith.constant 0 : index
    %c0_1 = arith.constant 0 : index
    %3 = vector.load %arg6[%c0, %c0_1] : memref<8x96xf32, #tpu.memory_space<vmem>>, vector<8x96xf32>
    %c0_2 = arith.constant 0 : index
    %c0_3 = arith.constant 0 : index
    %4 = vector.load %arg3[%c0_2, %c0_3] : memref<8x32xf32, #tpu.memory_space<vmem>>, vector<8x32xf32>
    %c0_4 = arith.constant 0 : index
    %c0_5 = arith.constant 0 : index
    %5 = vector.load %arg4[%c0_4, %c0_5] : memref<32x96xf32, #tpu.memory_space<vmem>>, vector<32x96xf32>
    %cst = arith.constant dense<0.000000e+00> : vector<8x96xf32>
    %6 = tpu.matmul %4, %5, %cst {dimension_numbers = #tpu.dot_dimension_numbers<[1], [0], [0], [1], [0, 0, 1, 1], [], []>} : vector<8x32xf32>, vector<32x96xf32>, vector<8x96xf32> -> vector<8x96xf32>
    %7 = arith.addf %3, %6 : vector<8x96xf32>
    %c0_6 = arith.constant 0 : index
    %c0_7 = arith.constant 0 : index
    %8 = vector.load %arg6[%c0_6, %c0_7] : memref<8x96xf32, #tpu.memory_space<vmem>>, vector<8x96xf32>
    tpu.vector_store %arg6[%c0_6, %c0_7], %7 {strides = array<i32>} : memref<8x96xf32, #tpu.memory_space<vmem>>, vector<8x96xf32>,
    %c0_i32_8 = arith.constant 0 : i32
    %9 = arith.cmpi eq, %arg2, %c0_i32_8 : i32
    %10 = arith.extui %9 : i1 to i32
    %c0_i32_9 = arith.constant 0 : i32
    %11 = arith.cmpi ne, %10, %c0_i32_9 : i32
    scf.if %11 {
      %c0_10 = arith.constant 0 : index
      %c0_11 = arith.constant 0 : index
      %12 = vector.load %arg6[%c0_10, %c0_11] : memref<8x96xf32, #tpu.memory_space<vmem>>, vector<8x96xf32>
      %cst_12 = arith.constant -8.000000e+00 : f32
      %cst_13 = arith.constant 8.000000e+00 : f32
      %13 = vector.broadcast %cst_12 : f32 to vector<8x96xf32>
      %14 = arith.maximumf %13, %12 : vector<8x96xf32>
      %15 = vector.broadcast %cst_13 : f32 to vector<8x96xf32>
      %16 = arith.minimumf %15, %14 : vector<8x96xf32>
      %c0_14 = arith.constant 0 : index
      %c0_15 = arith.constant 0 : index
      %17 = vector.load %arg5[%c0_14, %c0_15] : memref<8x96xf32, #tpu.memory_space<vmem>>, vector<8x96xf32>
      tpu.vector_store %arg5[%c0_14, %c0_15], %16 {strides = array<i32>} : memref<8x96xf32, #tpu.memory_space<vmem>>, vector<8x96xf32>,
    } else {
    }
    return
  }
  func.func @transform_0(%arg0: i32, %arg1: i32, %arg2: i32) -> (i32, i32) {
    %c0_i32 = arith.constant 0 : i32
    return %arg0, %arg2 : i32, i32
  }
  func.func @transform_1(%arg0: i32, %arg1: i32, %arg2: i32) -> (i32, i32) {
    %c0_i32 = arith.constant 0 : i32
    return %arg2, %arg1 : i32, i32
  }
  func.func @transform_2(%arg0: i32, %arg1: i32, %arg2: i32) -> (i32, i32) {
    %c0_i32 = arith.constant 0 : i32
    return %arg0, %arg1 : i32, i32
  }
}

</mosaic_0001>

<llo_original>
// kernel: tpu_custom_call.1
$region0: #{tpu_custom_call.1}
  #allocation0 [shape = 'u32[]', space=smem, size = 0x4, offset = 0x4, fixed_abs, tag = 'smem constant byte address 0x4 - core index']
  #allocation1 [shape = 'u32[144,128]{1,0:T(1,128)}', space=vmem, size = 0x12000, scoped, tag = 'internal scratch']
  #allocation2 [shape = 'f32[8,96]{1,0:T(8,128)}', space=vmem, size = 0x1000, scoped, tag = 'scratch operand']
  %s0 = inlined_call_operand.hbm [shape: f32[8,32], index: 0, kind: input, shape index: {}]
  %s1 = inlined_call_operand.hbm [shape: f32[32,96], index: 1, kind: input, shape index: {}]
  %s2 = inlined_call_operand.hbm [shape: f32[8,96], index: 2, kind: output, shape index: {}]
  %s3 = sld [smem:[#allocation0]]
  $region34: #{tpu_custom_call.1} parent=0
    _
  %s5 = ssub.s32 1, %s3
  %s6 = scalar_select 0, %s5, %s3
  $region1: #{tpu_custom_call.1} parent=0
    #allocation3 [shape = 'u8[4096]{0}', space=vmem, size = 0x1000, scoped, tag = 'input window, operand 0, single buffered']
    #allocation4 [shape = 's32[1]{0}', space=sflag, size = 0x4, scoped, tag = 'scoped memory for tpu_custom_call.1']
    #allocation5 [shape = 's32[1]{0}', space=sflag, size = 0x4, scoped, tag = 'scoped memory for tpu_custom_call.1']
    #allocation6 [shape = 'u8[16384]{0}', space=vmem, size = 0x4000, scoped, tag = 'input window, operand 1, single buffered']
    #allocation7 [shape = 's32[1]{0}', space=sflag, size = 0x4, scoped, tag = 'scoped memory for tpu_custom_call.1']
    #allocation8 [shape = 'u8[4096]{0}', space=vmem, size = 0x1000, scoped, tag = 'output window, operand 0, single buffered']
    %7 = vsyncpa [#allocation4], 0
    %8 = vsyncpa [#allocation7], 0
    %9 = vsyncpa [#allocation5], 0
    // Predicated region
    $region2: #{tpu_custom_call.1} parent=1 // pred_check
      _
    $region3: #{tpu_custom_call.1} parent=1 // pred_check_branch
      %11 = sbr.rel (0) target = $region5
    $region4: #{tpu_custom_call.1} parent=1 // pred_region
      %s13 = ssub.s32 128, 128
      %14 = vsyncadd [#allocation4], %s13
      %s16 = sshll.u32 [#allocation3], 4
      %s17 = int_to_ptr.vmem [resolvable:$true] %s16
      %19 = dma.hbm_to_vmem [thread:$0]  %s0, 128, %s17, [#allocation4]
    $region5: #{tpu_custom_call.1} parent=1 // pred_fallthru
      _
    // Predicated region
    $region6: #{tpu_custom_call.1} parent=1 // pred_check
      _
    $region7: #{tpu_custom_call.1} parent=1 // pred_check_branch
      %21 = sbr.rel (0) target = $region9
    $region8: #{tpu_custom_call.1} parent=1 // pred_region
      %s23 = ssub.s32 512, 512
      %24 = vsyncadd [#allocation7], %s23
      %s25 = sshll.u32 [#allocation6], 4
      %s26 = int_to_ptr.vmem [resolvable:$true] %s25
      %31 = dma.hbm_to_vmem [thread:$0]  %s1, 512, %s26, [#allocation7], 128, 128, 8
    $region9: #{tpu_custom_call.1} parent=1 // pred_fallthru
      _
    // Predicated region
    $region10: #{tpu_custom_call.1} parent=1 // pred_check
      _
    $region11: #{tpu_custom_call.1} parent=1 // pred_check_branch
      %33 = sbr.rel (0) target = $region13
    $region12: #{tpu_custom_call.1} parent=1 // pred_region
      %34 = dma.done [#allocation4], 128
    $region13: #{tpu_custom_call.1} parent=1 // pred_fallthru
      _
    // Predicated region
    $region14: #{tpu_custom_call.1} parent=1 // pred_check
      _
    $region15: #{tpu_custom_call.1} parent=1 // pred_check_branch
      %36 = sbr.rel (0) target = $region17
    $region16: #{tpu_custom_call.1} parent=1 // pred_region
      %37 = dma.done [#allocation7], 512
    $region17: #{tpu_custom_call.1} parent=1 // pred_fallthru
      _
    %p38 = scmp.eq.s32.totalorder 0, 0
    // Predicated region
    $region18: #{tpu_custom_call.1} parent=1 // pred_check
      %p39 = pneg %p38
    $region19: #{tpu_custom_call.1} parent=1 // pred_check_branch
      %41 = sbr.rel (%p39) target = $region21
    $region20: #{tpu_custom_call.1} parent=1 // pred_region
      %vm42 = vcmask 785408
      %43 = vst.msk [vmem:[#allocation2] sm:$0xff] %vm42, 0.0
    $region21: #{tpu_custom_call.1} parent=1 // pred_fallthru
      _
    %v44 = vld [vmem:[#allocation2] sm:$0xff]
    %v45 = vld [vmem:[#allocation3] sm:$0xff]
    %v46 = vld [vmem:[#allocation6] sm:$0xff]
    %v47 = vld [vmem:[#allocation6 + $0x8] sm:$0xff]
    %v48 = vld [vmem:[#allocation6 + $0x10] sm:$0xff]
    %v49 = vld [vmem:[#allocation6 + $0x18] sm:$0xff]
    %vm50 = vcmask 261120
    %v52 = vsel %vm50, %v45, 0
    %54 = vmatprep.subr.mxu0 0.0
    %55 = vmatpush1.msra.mxu0 %v46
    %56 = vmatprep.subr.mxu0 0.0
    %57 = vmatpush1.msra.mxu0 %v47
    %58 = vmatprep.subr.mxu0 0.0
    %59 = vmatpush1.msra.mxu0 %v48
    %60 = vmatprep.subr.mxu0 0.0
    %61 = vmatpush1.msra.mxu0 %v49
    %62 = vmatprep.subr.mxu0 0.0
    %63 = vmatpush1.msra.mxu0 0.0
    %64 = vmatprep.subr.mxu0 0.0
    %65 = vmatpush1.msra.mxu0 0.0
    %66 = vmatprep.subr.mxu0 0.0
    %67 = vmatpush1.msra.mxu0 0.0
    %68 = vmatprep.subr.mxu0 0.0
    %69 = vmatpush1.msra.mxu0 0.0
    %70 = vmatprep.subr.mxu0 0.0
    %71 = vmatpush1.msra.mxu0 0.0
    %72 = vmatprep.subr.mxu0 0.0
    %73 = vmatpush1.msra.mxu0 0.0
    %74 = vmatprep.subr.mxu0 0.0
    %75 = vmatpush1.msra.mxu0 0.0
    %76 = vmatprep.subr.mxu0 0.0
    %77 = vmatpush1.msra.mxu0 0.0
    %78 = vmatprep.subr.mxu0 0.0
    %79 = vmatpush1.msra.mxu0 0.0
    %80 = vmatprep.subr.mxu0 0.0
    %81 = vmatpush1.msra.mxu0 0.0
    %82 = vmatprep.subr.mxu0 0.0
    %83 = vmatpush1.msra.mxu0 0.0
    %84 = vmatprep.subr.mxu0 0.0
    %85 = vmatpush1.msra.mxu0 0.0
    %86 = vmatprep.subr.mxu0 0.0
    %87 = vmatpush1.msra.mxu0 0.0
    %88 = vmatprep.subr.mxu0 0.0
    %89 = vmatpush1.msra.mxu0 0.0
    %90 = vmatprep.subr.mxu0 0.0
    %91 = vmatpush1.msra.mxu0 0.0
    %92 = vmatprep.subr.mxu0 0.0
    %93 = vmatpush1.msra.mxu0 0.0
    %94 = vmatprep.subr.mxu0 0.0
    %95 = vmatpush1.msra.mxu0 0.0
    %96 = vmatprep.subr.mxu0 0.0
    %97 = vmatpush1.msra.mxu0 0.0
    %98 = vmatprep.subr.mxu0 0.0
    %99 = vmatpush1.msra.mxu0 0.0
    %100 = vmatprep.subr.mxu0 0.0
    %101 = vmatpush1.msra.mxu0 0.0
    %102 = vmatprep.subr.mxu0 0.0
    %103 = vmatpush1.msra.mxu0 0.0
    %104 = vmatprep.subr.mxu0 0.0
    %105 = vmatpush1.msra.mxu0 0.0
    %106 = vmatprep.subr.mxu0 0.0
    %107 = vmatpush1.msra.mxu0 0.0
    %108 = vmatprep.subr.mxu0 0.0
    %109 = vmatpush1.msra.mxu0 0.0
    %110 = vmatprep.subr.mxu0 0.0
    %111 = vmatpush1.msra.mxu0 0.0
    %112 = vmatprep.subr.mxu0 0.0
    %113 = vmatpush1.msra.mxu0 0.0
    %114 = vmatprep.subr.mxu0 0.0
    %115 = vmatpush1.msra.mxu0 0.0
    %116 = vmatprep.subr.mxu0 0.0
    %117 = vmatpush1.msra.mxu0 0.0
    %118 = vmatprep.mubr.f32.mxu0 0.0
    %119 = vmatmul.mubr.f32.gmra.mrb[0].mxu0 %v52
    %v120 = vpop.f32.mrb[0].mxu0
    %v121 = vadd.f32 0.0, %v120
    %v122 = vpop.f32.mrb[0].mxu0
    %123 = vdwg.mxu0
    %v124 = vadd.f32 %v44, %v121
    %vm125 = vcmask 785408
    %126 = vst.msk [vmem:[#allocation2] sm:$0xff] %vm125, %v124
    // Predicated region
    $region22: #{tpu_custom_call.1} parent=1 // pred_check
      %p127 = pneg %p38
    $region23: #{tpu_custom_call.1} parent=1 // pred_check_branch
      %129 = sbr.rel (%p127) target = $region25
    $region24: #{tpu_custom_call.1} parent=1 // pred_region
      %v130 = vld [vmem:[#allocation2] sm:$0xff]
      %v131 = vmax.f32 %v130, -8.0
      %v132 = vmin.f32 %v131, 8.0
      %133 = vst.msk [vmem:[#allocation8] sm:$0xff] %vm125, %v132
    $region25: #{tpu_custom_call.1} parent=1 // pred_fallthru
      _
    // Predicated region
    $region26: #{tpu_custom_call.1} parent=1 // pred_check
      _
    $region27: #{tpu_custom_call.1} parent=1 // pred_check_branch
      %135 = sbr.rel (0) target = $region29
    $region28: #{tpu_custom_call.1} parent=1 // pred_region
      %s137 = ssub.s32 128, 128
      %138 = vsyncadd [#allocation5], %s137
      %s140 = sshll.u32 [#allocation8], 4
      %s141 = int_to_ptr.vmem [resolvable:$true] %s140
      %143 = dma.vmem_to_hbm [thread:$0]  %s141, 128, %s2, [#allocation5]
    $region29: #{tpu_custom_call.1} parent=1 // pred_fallthru
      _
    // Predicated region
    $region30: #{tpu_custom_call.1} parent=1 // pred_check
      _
    $region31: #{tpu_custom_call.1} parent=1 // pred_check_branch
      %145 = sbr.rel (0) target = $region33
    $region32: #{tpu_custom_call.1} parent=1 // pred_region
      %146 = dma.done [#allocation5], 128
    $region33: #{tpu_custom_call.1} parent=1 // pred_fallthru
      _
    %147 = vsyncpa [#allocation4], 1
    %148 = vsyncpa [#allocation7], 1
    %149 = vsyncpa [#allocation5], 1

</llo_original>
